<compile_context>
chip_gen: v7x
topology: tpu7x:2x2x1
jax: 0.10.0
libtpu: 0.0.40
codegen_flags: <defaults>
</compile_context>

<pallas_src>
import functools

import jax
import jax.numpy as jnp
from jax.experimental import pallas as pl
from jax.experimental.pallas import tpu as pltpu


def _round_up(x, m):
    return (x + m - 1) // m * m


def _xent_kernel(logits_ref, tgt_ref, wrow_ref, num_ref, den_ref, *, n_rows, tn):
    # logits_ref: (tn, C)  native dtype, upcast on load
    # tgt_ref   : (tn, 1)  i32 class index (-1 on padded rows -> matches nothing)
    # wrow_ref  : (tn, 1)  f32 per-row class weight w[y] (0 on padded rows)
    # num_ref/den_ref: (1, 8, 128) f32 per-block partials (scalar splat)
    step = pl.program_id(0)

    x = logits_ref[...].astype(jnp.float32)                     # (tn, C)
    tgt = tgt_ref[...]                                          # (tn, 1)
    w = wrow_ref[...]                                           # (tn, 1)
    rows, cols = x.shape

    # Rows of the last tile may be out-of-bounds (garbage) -> mask them.
    rid = step * tn + jax.lax.broadcasted_iota(jnp.int32, (rows, 1), 0)
    valid = rid < n_rows

    # one-hot target select on the lane (class) axis -- no gather op needed
    cls = jax.lax.broadcasted_iota(jnp.int32, (rows, cols), 1)
    onehot = cls == tgt

    # numerically-stable log-sum-exp per row (reductions respect logical C)
    m = jnp.max(x, axis=-1, keepdims=True)
    lse = m + jnp.log(jnp.sum(jnp.exp(x - m), axis=-1, keepdims=True))
    sel = jnp.sum(jnp.where(onehot, x, 0.0), axis=-1, keepdims=True)

    loss = jnp.where(valid, lse - sel, 0.0)                     # (tn, 1)
    wv = jnp.where(valid, w, 0.0)                               # (tn, 1)

    p_num = jnp.sum(wv * loss)                                  # scalar
    p_den = jnp.sum(wv)                                         # scalar

    # lane-dense per-block partials; wrapper reads element [g, 0, 0]
    num_ref[...] = jnp.full(num_ref.shape, p_num, jnp.float32)
    den_ref[...] = jnp.full(den_ref.shape, p_den, jnp.float32)


def cross_entropy_loss(y_hat, y, weight=None, target_block_bytes=4 << 20):
    """Mean-reduced (optionally class-weighted) cross-entropy.

    y_hat: (N, C) float logits (any float dtype, fed to the kernel as-is);
    y: (N,) integer class indices.
    """
    y_hat = jnp.asarray(y_hat)
    if not jnp.issubdtype(y_hat.dtype, jnp.floating):
        y_hat = y_hat.astype(jnp.float32)
    y = jnp.asarray(y).astype(jnp.int32)
    n, c = y_hat.shape

    # Per-row class weight w[y]: tiny (N,) gather done in plain JAX.
    # NOTE: invalid class ids / zero total weight behave like PyTorch's
    # undefined/NaN cases; no explicit guard (documented correctness concern).
    if weight is None:
        wrow = jnp.ones((n,), jnp.float32)
    else:
        wrow = jnp.asarray(weight, jnp.float32)[y]

    # Row-tile sized by bytes (~target_block_bytes of lane-padded logits),
    # (8,·)-aligned; a whole-array block when the batch fits in one tile.
    itemsize = jnp.dtype(y_hat.dtype).itemsize
    row_bytes = _round_up(c, 128) * itemsize
    tn = max(8, (target_block_bytes // row_bytes) // 8 * 8)
    if tn >= n:
        tn = n                              # single whole-array block
    grid = pl.cdiv(n, tn)
    npad = grid * tn                        # only the tiny side arrays get padded

    tgt = jnp.pad(y[:, None], ((0, npad - n), (0, 0)), constant_values=-1)
    wcol = jnp.pad(wrow[:, None], ((0, npad - n), (0, 0)))

    kernel = functools.partial(_xent_kernel, n_rows=n, tn=tn)

    num, den = pl.pallas_call(
        kernel,
        out_shape=(jax.ShapeDtypeStruct((grid, 8, 128), jnp.float32),
                   jax.ShapeDtypeStruct((grid, 8, 128), jnp.float32)),
        grid_spec=pltpu.PrefetchScalarGridSpec(
            num_scalar_prefetch=0,
            grid=(grid,),
            in_specs=[
                pl.BlockSpec((tn, c), lambda i: (i, 0)),   # logits (native dtype)
                pl.BlockSpec((tn, 1), lambda i: (i, 0)),   # targets
                pl.BlockSpec((tn, 1), lambda i: (i, 0)),   # per-row weights
            ],
            out_specs=(
                pl.BlockSpec((1, 8, 128), lambda i: (i, 0, 0)),
                pl.BlockSpec((1, 8, 128), lambda i: (i, 0, 0)),
            ),
        ),
        compiler_params=pltpu.CompilerParams(
            # disjoint output blocks per step -> batch axis is truly parallel
            # (dual-TC sharding on v7x, no cross-step accumulator).
            dimension_semantics=("parallel",)),
    )(y_hat, tgt, wcol)

    return jnp.sum(num[:, 0, 0]) / jnp.sum(den[:, 0, 0])


def xent_wrapper_forward(y_hat, y, reweighted=False, weight=None):
    """Mirrors xent_wrapper: weighted CE when `reweighted`, plain CE otherwise."""
    return cross_entropy_loss(y_hat, y, weight=weight if reweighted else None)


def ref_xent(y_hat, y, weight=None):
    """Pure-JAX reference matching torch.nn.CrossEntropyLoss (mean reduction)."""
    y = y.astype(jnp.int32)
    logp = jax.nn.log_softmax(jnp.asarray(y_hat, jnp.float32), axis=-1)
    nll = -jnp.take_along_axis(logp, y[:, None], axis=-1)[:, 0]
    if weight is None:
        return jnp.mean(nll)
    w = jnp.asarray(weight, jnp.float32)[y]
    return jnp.sum(w * nll) / jnp.sum(w)


if __name__ == "__main__":
    key = jax.random.PRNGKey(0)
    k1, k2, k3, k4, k5 = jax.random.split(key, 5)

    # small shapes consistent with the module: (batch, num_classes) logits
    N, C = 16, 4
    y_hat = jax.random.normal(k1, (N, C), jnp.float32)
    y = jax.random.randint(k2, (N,), 0, C, jnp.int32)
    w = 0.5 + jax.random.uniform(k3, (C,), jnp.float32)

    # unweighted (reweighted=False)
    out_u = jax.block_until_ready(xent_wrapper_forward(y_hat, y, reweighted=False))
    ref_u = ref_xent(y_hat, y)
    assert jnp.allclose(out_u, ref_u, atol=1e-5, rtol=1e-5), (out_u, ref_u)

    # class-weighted (reweighted=True)
    out_w = jax.block_until_ready(
        xent_wrapper_forward(y_hat, y, reweighted=True, weight=w))
    ref_w = ref_xent(y_hat, y, w)
    assert jnp.allclose(out_w, ref_w, atol=1e-5, rtol=1e-5), (out_w, ref_w)

    # larger, non-aligned case (single whole-array block, n % 8 != 0)
    N2, C2 = 300, 7
    y_hat2 = jax.random.normal(k4, (N2, C2), jnp.float32)
    y2 = jax.random.randint(k5, (N2,), 0, C2, jnp.int32)
    w2 = 0.5 + jax.random.uniform(k3, (C2,), jnp.float32)
    out2 = jax.block_until_ready(
        xent_wrapper_forward(y_hat2, y2, reweighted=True, weight=w2))
    ref2 = ref_xent(y_hat2, y2, w2)
    assert jnp.allclose(out2, ref2, atol=1e-4, rtol=1e-4), (out2, ref2)

    # forced multi-block grid (ragged last tile -> exercises the row mask and
    # the per-block parallel partial outputs), f32
    out3 = jax.block_until_ready(cross_entropy_loss(
        y_hat2, y2, weight=w2, target_block_bytes=128 * 1024))
    assert jnp.allclose(out3, ref2, atol=1e-4, rtol=1e-4), (out3, ref2)

    # bf16 logits fed straight to the kernel (no wrapper upcast), multi-block
    y_hat2_bf16 = y_hat2.astype(jnp.bfloat16)
    out4 = jax.block_until_ready(cross_entropy_loss(
        y_hat2_bf16, y2, weight=w2, target_block_bytes=64 * 1024))
    ref4 = ref_xent(y_hat2_bf16.astype(jnp.float32), y2, w2)
    assert jnp.allclose(out4, ref4, atol=2e-2, rtol=2e-2), (out4, ref4)

    print("KERNEL_OK")
</pallas_src>

<mosaic_0001>
module attributes {stable_mosaic.version = 11 : i64} {
  func.func @_xent_kernel(%arg0: i32, %arg1: memref<16x4xf32, #tpu.memory_space<vmem>>, %arg2: memref<16x1xi32, #tpu.memory_space<vmem>>, %arg3: memref<16x1xf32, #tpu.memory_space<vmem>>, %arg4: memref<1x8x128xf32, #tpu.memory_space<vmem>>, %arg5: memref<1x8x128xf32, #tpu.memory_space<vmem>>) attributes {dimension_semantics = [#tpu.dimension_semantics<parallel>], iteration_bounds = array<i64: 1>, scalar_prefetch = 0 : i64, scratch_operands = 0 : i64, tpu.core_type = #tpu.core_type<tc>, window_params = [{transform_indices = @transform_0, window_bounds = array<i64: 16, 4>}, {transform_indices = @transform_1, window_bounds = array<i64: 16, 1>}, {transform_indices = @transform_2, window_bounds = array<i64: 16, 1>}, {transform_indices = @transform_3, window_bounds = array<i64: 1, 8, 128>}, {transform_indices = @transform_4, window_bounds = array<i64: 1, 8, 128>}]} {
    %c0 = arith.constant 0 : index
    %c0_0 = arith.constant 0 : index
    %0 = vector.load %arg1[%c0, %c0_0] : memref<16x4xf32, #tpu.memory_space<vmem>>, vector<16x4xf32>
    %c0_1 = arith.constant 0 : index
    %c0_2 = arith.constant 0 : index
    %1 = vector.load %arg2[%c0_1, %c0_2] : memref<16x1xi32, #tpu.memory_space<vmem>>, vector<16x1xi32>
    %c0_3 = arith.constant 0 : index
    %c0_4 = arith.constant 0 : index
    %2 = vector.load %arg3[%c0_3, %c0_4] : memref<16x1xf32, #tpu.memory_space<vmem>>, vector<16x1xf32>
    %c16_i32 = arith.constant 16 : i32
    %3 = arith.muli %arg0, %c16_i32 : i32
    %4 = tpu.iota {dimensions = array<i32: 0>} : vector<16x1xi32>
    %5 = vector.broadcast %3 : i32 to vector<16x1xi32>
    %6 = arith.addi %5, %4 : vector<16x1xi32>
    %c16_i32_5 = arith.constant 16 : i32
    %7 = vector.broadcast %c16_i32_5 : i32 to vector<16x1xi32>
    %8 = arith.cmpi slt, %6, %7 : vector<16x1xi32>
    %9 = tpu.iota {dimensions = array<i32: 1>} : vector<16x4xi32>
    %10 = vector.broadcast %1 : vector<16x1xi32> to vector<16x4xi32>
    %11 = arith.cmpi eq, %9, %10 : vector<16x4xi32>
    %cst = arith.constant dense<0xFF800000> : vector<16xf32>
    %12 = vector.multi_reduction <maximumf>, %0, %cst [1] : vector<16x4xf32> to vector<16xf32>
    %13 = vector.shape_cast %12 : vector<16xf32> to vector<16x1xf32>
    %14 = vector.broadcast %13 : vector<16x1xf32> to vector<16x4xf32>
    %15 = arith.subf %0, %14 : vector<16x4xf32>
    %16 = math.exp %15 : vector<16x4xf32>
    %cst_6 = arith.constant dense<0.000000e+00> : vector<16xf32>
    %17 = vector.multi_reduction <add>, %16, %cst_6 [1] : vector<16x4xf32> to vector<16xf32>
    %18 = vector.shape_cast %17 : vector<16xf32> to vector<16x1xf32>
    %19 = math.log %18 : vector<16x1xf32>
    %20 = arith.addf %13, %19 : vector<16x1xf32>
    %cst_7 = arith.constant 0.000000e+00 : f32
    %21 = vector.broadcast %cst_7 : f32 to vector<16x4xf32>
    %22 = arith.select %11, %0, %21 : vector<16x4xi1>, vector<16x4xf32>
    %cst_8 = arith.constant dense<0.000000e+00> : vector<16xf32>
    %23 = vector.multi_reduction <add>, %22, %cst_8 [1] : vector<16x4xf32> to vector<16xf32>
    %24 = vector.shape_cast %23 : vector<16xf32> to vector<16x1xf32>
    %25 = arith.subf %20, %24 : vector<16x1xf32>
    %cst_9 = arith.constant 0.000000e+00 : f32
    %26 = vector.broadcast %cst_9 : f32 to vector<16x1xf32>
    %27 = arith.select %8, %25, %26 : vector<16x1xi1>, vector<16x1xf32>
    %cst_10 = arith.constant 0.000000e+00 : f32
    %28 = vector.broadcast %cst_10 : f32 to vector<16x1xf32>
    %29 = arith.select %8, %2, %28 : vector<16x1xi1>, vector<16x1xf32>
    %30 = arith.mulf %29, %27 : vector<16x1xf32>
    %31 = vector.shape_cast %30 : vector<16x1xf32> to vector<1x16x1xf32>
    %cst_11 = arith.constant dense<0.000000e+00> : vector<1xf32>
    %32 = vector.multi_reduction <add>, %31, %cst_11 [1, 2] : vector<1x16x1xf32> to vector<1xf32>
    %33 = vector.shape_cast %32 : vector<1xf32> to vector<1x1x1xf32>
    %34 = vector.extract %33[0, 0, 0] : f32 from vector<1x1x1xf32>
    %35 = vector.shape_cast %29 : vector<16x1xf32> to vector<1x16x1xf32>
    %cst_12 = arith.constant dense<0.000000e+00> : vector<1xf32>
    %36 = vector.multi_reduction <add>, %35, %cst_12 [1, 2] : vector<1x16x1xf32> to vector<1xf32>
    %37 = vector.shape_cast %36 : vector<1xf32> to vector<1x1x1xf32>
    %38 = vector.extract %37[0, 0, 0] : f32 from vector<1x1x1xf32>
    %39 = vector.broadcast %34 : f32 to vector<1x8x128xf32>
    %c0_13 = arith.constant 0 : index
    %c0_14 = arith.constant 0 : index
    %c0_15 = arith.constant 0 : index
    %40 = vector.load %arg4[%c0_13, %c0_14, %c0_15] : memref<1x8x128xf32, #tpu.memory_space<vmem>>, vector<1x8x128xf32>
    tpu.vector_store %arg4[%c0_13, %c0_14, %c0_15], %39 {strides = array<i32>} : memref<1x8x128xf32, #tpu.memory_space<vmem>>, vector<1x8x128xf32>,
    %41 = vector.broadcast %38 : f32 to vector<1x8x128xf32>
    %c0_16 = arith.constant 0 : index
    %c0_17 = arith.constant 0 : index
    %c0_18 = arith.constant 0 : index
    %42 = vector.load %arg5[%c0_16, %c0_17, %c0_18] : memref<1x8x128xf32, #tpu.memory_space<vmem>>, vector<1x8x128xf32>
    tpu.vector_store %arg5[%c0_16, %c0_17, %c0_18], %41 {strides = array<i32>} : memref<1x8x128xf32, #tpu.memory_space<vmem>>, vector<1x8x128xf32>,
    return
  }
  func.func @transform_0(%arg0: i32) -> (i32, i32) {
    %c0_i32 = arith.constant 0 : i32
    %c0_i32_0 = arith.constant 0 : i32
    return %arg0, %c0_i32 : i32, i32
  }
  func.func @transform_1(%arg0: i32) -> (i32, i32) {
    %c0_i32 = arith.constant 0 : i32
    %c0_i32_0 = arith.constant 0 : i32
    return %arg0, %c0_i32 : i32, i32
  }
  func.func @transform_2(%arg0: i32) -> (i32, i32) {
    %c0_i32 = arith.constant 0 : i32
    %c0_i32_0 = arith.constant 0 : i32
    return %arg0, %c0_i32 : i32, i32
  }
  func.func @transform_3(%arg0: i32) -> (i32, i32, i32) {
    %c0_i32 = arith.constant 0 : i32
    %c0_i32_0 = arith.constant 0 : i32
    %c0_i32_1 = arith.constant 0 : i32
    return %arg0, %c0_i32, %c0_i32_0 : i32, i32, i32
  }
  func.func @transform_4(%arg0: i32) -> (i32, i32, i32) {
    %c0_i32 = arith.constant 0 : i32
    %c0_i32_0 = arith.constant 0 : i32
    %c0_i32_1 = arith.constant 0 : i32
    return %arg0, %c0_i32, %c0_i32_0 : i32, i32, i32
  }
}

</mosaic_0001>

<llo_original>
// kernel: tpu_custom_call.1
$region0: #{tpu_custom_call.1}
  #allocation0 [shape = 'u32[]', space=smem, size = 0x4, offset = 0x4, fixed_abs, tag = 'smem constant byte address 0x4 - core index']
  #allocation1 [shape = 'u32[144,128]{1,0:T(1,128)}', space=vmem, size = 0x12000, scoped, tag = 'internal scratch']
  %s0 = inlined_call_operand.vmem [shape: f32[16,4], index: 0, kind: input, shape index: {}]
  %s1 = inlined_call_operand.vmem [shape: s32[16,1], index: 1, kind: input, shape index: {}]
  %s2 = inlined_call_operand.vmem [shape: f32[16,1], index: 2, kind: input, shape index: {}]
  %s3 = inlined_call_operand.hbm [shape: f32[1,8,128], index: 3, kind: output, shape index: {0}]
  %s4 = inlined_call_operand.hbm [shape: f32[1,8,128], index: 4, kind: output, shape index: {1}]
  %5 = xla_tuple %s3, %s4
  %s6 = sld [smem:[#allocation0]]
  $region30: #{tpu_custom_call.1} parent=0
    _
  %s8 = ssub.s32 1, %s6
  %s9 = scalar_select 0, %s8, %s6
  $region1: #{tpu_custom_call.1} parent=0
    #allocation2 [shape = 'u8[4096]{0}', space=vmem, size = 0x1000, scoped, tag = 'output window, operand 0, single buffered']
    #allocation3 [shape = 's32[1]{0}', space=sflag, size = 0x4, scoped, tag = 'scoped memory for tpu_custom_call.1']
    #allocation4 [shape = 'u8[4096]{0}', space=vmem, size = 0x1000, scoped, tag = 'output window, operand 1, single buffered']
    #allocation5 [shape = 's32[1]{0}', space=sflag, size = 0x4, scoped, tag = 'scoped memory for tpu_custom_call.1']
    %10 = vsyncpa [#allocation3], 0
    %11 = vsyncpa [#allocation5], 0
    // Predicated region
    $region2: #{tpu_custom_call.1} parent=1 // pred_check
      _
    $region3: #{tpu_custom_call.1} parent=1 // pred_check_branch
      %13 = sbr.rel (0) target = $region5
    $region4: #{tpu_custom_call.1} parent=1 // pred_region
      _
    $region5: #{tpu_custom_call.1} parent=1 // pred_fallthru
      _
    // Predicated region
    $region6: #{tpu_custom_call.1} parent=1 // pred_check
      _
    $region7: #{tpu_custom_call.1} parent=1 // pred_check_branch
      %15 = sbr.rel (0) target = $region9
    $region8: #{tpu_custom_call.1} parent=1 // pred_region
      _
    $region9: #{tpu_custom_call.1} parent=1 // pred_fallthru
      _
    // Predicated region
    $region10: #{tpu_custom_call.1} parent=1 // pred_check
      _
    $region11: #{tpu_custom_call.1} parent=1 // pred_check_branch
      %17 = sbr.rel (0) target = $region13
    $region12: #{tpu_custom_call.1} parent=1 // pred_region
      _
    $region13: #{tpu_custom_call.1} parent=1 // pred_fallthru
      _
    %v18 = vld [vmem:[%s0] sm:$0xff]
    %v19 = vld [vmem:[%s0 + $0x8] sm:$0xff]
    %v20 = vld [vmem:[%s1] sm:$0xff]
    %v21 = vld [vmem:[%s1 + $0x8] sm:$0xff]
    %v22 = vld [vmem:[%s2] sm:$0xff]
    %v23 = vld [vmem:[%s2 + $0x8] sm:$0xff]
    %s24 = smul.u32 0, 16
    %v25 = vlaneseq
    %v26 = vshrl.u32 %v25, 7
    %v27 = vadd.s32 %v26, 8
    %v28 = vstv %s24
    %v29 = vadd.s32 %v28, %v26
    %v30 = vadd.s32 %v28, %v27
    %vm31 = vcmp.lt.s32.totalorder %v29, 16
    %vm32 = vcmp.lt.s32.totalorder %v30, 16
    %v33 = vlaneseq
    %v34 = vand.u32 %v33, 127
    %35 = vset.pattern.permute.xlu0 0
    %36 = vperm.xlu0 %35, %v20
    %v37 = vpop.permute.xlu0 %36
    %38 = vset.pattern.permute.xlu0 0
    %39 = vperm.xlu0 %38, %v21
    %v40 = vpop.permute.xlu0 %39
    %vm41 = vcmp.eq.s32.totalorder %v34, %v37
    %vm42 = vcmp.eq.s32.totalorder %v34, %v40
    %vm43 = vcmask 31744
    %v44 = vsel %vm43, %v18, -inf
    %45 = vmax.xlane.f32.xlu0 %v44
    %v46 = vpop.xlane.xlu0 %45
    %v47 = vsel %vm43, %v19, -inf
    %48 = vmax.xlane.f32.xlu0 %v47
    %v49 = vpop.xlane.xlu0 %48
    %v50 = vsub.f32 %v18, %v46
    %v51 = vsub.f32 %v19, %v49
    %v52 = vmul.f32 %v50, 1.442695
    %v53 = vpow.pop %v52
    %v54 = vmul.f32 %v51, 1.442695
    %v55 = vpow.pop %v54
    %v56 = vsel %vm43, %v53, 0.0
    %57 = vadd.xlane.f32.xlu0 %v56
    %v58 = vpop.xlane.xlu0 %57
    %v59 = vsel %vm43, %v55, 0.0
    %60 = vadd.xlane.f32.xlu0 %v59
    %v61 = vpop.xlane.xlu0 %60
    %v62 = vlog2.pop %v58
    %v63 = vmul.f32 %v62, 0.6931472
    %v64 = vlog2.pop %v61
    %v65 = vmul.f32 %v64, 0.6931472
    %v66 = vadd.f32 %v46, %v63
    %v67 = vadd.f32 %v49, %v65
    %v68 = vsel %vm41, %v18, 0.0
    %v69 = vsel %vm42, %v19, 0.0
    %v70 = vsel %vm43, %v68, 0.0
    %71 = vadd.xlane.f32.xlu0 %v70
    %v72 = vpop.xlane.xlu0 %71
    %v73 = vsel %vm43, %v69, 0.0
    %74 = vadd.xlane.f32.xlu0 %v73
    %v75 = vpop.xlane.xlu0 %74
    %v76 = vsub.f32 %v66, %v72
    %v77 = vsub.f32 %v67, %v75
    %v78 = vsel %vm31, %v76, 0.0
    %v79 = vsel %vm32, %v77, 0.0
    %v80 = vsel %vm31, %v22, 0.0
    %v81 = vsel %vm32, %v23, 0.0
    %v82 = vmul.f32 %v80, %v78
    %v83 = vmul.f32 %v81, %v79
    %vm84 = vcmask 7168
    %v85 = vsel %vm84, %v82, 0.0
    %v86 = vsel %vm84, %v83, 0.0
    %v87 = vadd.f32 %v85, %v86
    %88 = vadd.xlane.f32.xlu0 %v87
    %v89 = vpop.xlane.xlu0 %88
    %v90 = vrot.slane %v89, 4
    %v91 = vadd.f32 %v89, %v90
    %v92 = vrot.slane %v91, 2
    %v93 = vadd.f32 %v91, %v92
    %v94 = vrot.slane %v93, 1
    %v95 = vadd.f32 %v93, %v94
    %s96 = vtos %v95
    %v97 = vsel %vm84, %v80, 0.0
    %v98 = vsel %vm84, %v81, 0.0
    %v99 = vadd.f32 %v97, %v98
    %100 = vadd.xlane.f32.xlu0 %v99
    %v101 = vpop.xlane.xlu0 %100
    %v102 = vrot.slane %v101, 4
    %v103 = vadd.f32 %v101, %v102
    %v104 = vrot.slane %v103, 2
    %v105 = vadd.f32 %v103, %v104
    %v106 = vrot.slane %v105, 1
    %v107 = vadd.f32 %v105, %v106
    %s108 = vtos %v107
    %v109 = vstv %s96
    %110 = vst [vmem:[#allocation2] sm:$0xff] %v109
    %v111 = vstv %s108
    %112 = vst [vmem:[#allocation4] sm:$0xff] %v111
    // Predicated region
    $region14: #{tpu_custom_call.1} parent=1 // pred_check
      _
    $region15: #{tpu_custom_call.1} parent=1 // pred_check_branch
      %114 = sbr.rel (0) target = $region17
    $region16: #{tpu_custom_call.1} parent=1 // pred_region
      %s116 = ssub.s32 128, 128
      %117 = vsyncadd [#allocation3], %s116
      %s119 = sshll.u32 [#allocation2], 4
      %s120 = int_to_ptr.vmem [resolvable:$true] %s119
      %122 = dma.vmem_to_hbm [thread:$0]  %s120, 128, %s3, [#allocation3]
    $region17: #{tpu_custom_call.1} parent=1 // pred_fallthru
      _
    // Predicated region
    $region18: #{tpu_custom_call.1} parent=1 // pred_check
      _
    $region19: #{tpu_custom_call.1} parent=1 // pred_check_branch
      %124 = sbr.rel (0) target = $region21
    $region20: #{tpu_custom_call.1} parent=1 // pred_region
      %s126 = ssub.s32 128, 128
      %127 = vsyncadd [#allocation5], %s126
      %s129 = sshll.u32 [#allocation4], 4
      %s130 = int_to_ptr.vmem [resolvable:$true] %s129
      %132 = dma.vmem_to_hbm [thread:$0]  %s130, 128, %s4, [#allocation5]
    $region21: #{tpu_custom_call.1} parent=1 // pred_fallthru
      _
    // Predicated region
    $region22: #{tpu_custom_call.1} parent=1 // pred_check
      _
    $region23: #{tpu_custom_call.1} parent=1 // pred_check_branch
      %134 = sbr.rel (0) target = $region25
    $region24: #{tpu_custom_call.1} parent=1 // pred_region
      %135 = dma.done [#allocation3], 128
    $region25: #{tpu_custom_call.1} parent=1 // pred_fallthru
      _
    // Predicated region
    $region26: #{tpu_custom_call.1} parent=1 // pred_check
      _
    $region27: #{tpu_custom_call.1} parent=1 // pred_check_branch
      %137 = sbr.rel (0) target = $region29
    $region28: #{tpu_custom_call.1} parent=1 // pred_region
      %138 = dma.done [#allocation5], 128
    $region29: #{tpu_custom_call.1} parent=1 // pred_fallthru
      _
    %139 = vsyncpa [#allocation3], 1
    %140 = vsyncpa [#allocation5], 1

</llo_original>
